<compile_context>
chip_gen: v5e
topology: v5e:2x2
jax: 0.10.0
libtpu: 0.0.40
codegen_flags: <defaults>
</compile_context>

<pallas_src>
import math

import jax
import jax.numpy as jnp
from jax.experimental import pallas as pl
from jax.experimental.pallas import tpu as pltpu


def _pick_block_rows(n_rows: int, max_rows: int = 2048, min_rows: int = 8) -> int:
    """Largest power-of-two row tile <= max_rows that still yields >= 8 grid
    steps when the input allows it (never below the 8-row sublane granule)."""
    rows = max_rows
    while rows > min_rows and pl.cdiv(n_rows, rows) < 8:
        rows //= 2
    return max(rows, min_rows)


def bessel_basis_layer(dist,
                       num_radial: int = 12,
                       cutoff: float = 5.0,
                       envelope_exponent: int = 5,
                       freq=None,
                       max_block_rows: int = 2048):
    """Pallas TPU implementation of BesselBasisLayer.forward.

    `dist` may have any shape; output has shape dist.shape + (num_radial,),
    matching `dist.unsqueeze(-1)` semantics of the PyTorch module.
    `freq` defaults to the module's deterministic init: [1..num_radial] * pi.
    """
    # ----- trace-time constants from __init__ (baked into the kernel) -------
    p = envelope_exponent + 1
    a = -(p + 1) * (p + 2) / 2.0
    b = float(p * (p + 2))
    c = -p * (p + 1) / 2.0
    cutoff_f = float(cutoff)

    # Learnable parameter (kept as a runtime input, deterministic default).
    if freq is None:
        freq = jnp.arange(1, num_radial + 1, dtype=jnp.float32) * math.pi
    freq_row = jnp.asarray(freq, dtype=jnp.float32).reshape(1, num_radial)

    orig_shape = dist.shape
    dist_col = jnp.reshape(dist, (-1, 1)).astype(jnp.float32)        # (N, 1)
    n = dist_col.shape[0]

    block_rows = _pick_block_rows(n, max_block_rows)
    grid = (pl.cdiv(n, block_rows),)

    def _bessel_kernel(dist_ref, freq_ref, out_ref):
        # dist_ref: (TM, 1)   VMEM tile of raw distances
        # freq_ref: (1, G)    full frequency row (VMEM-resident, constant block)
        # out_ref:  (TM, G)   output tile
        d = dist_ref[...] / cutoff_f                                  # (TM, 1)
        # Envelope (per-distance): 1/x + a*x^(p-1) + b*x^p + c*x^(p+1)
        x_p0 = d ** (p - 1)
        x_p1 = x_p0 * d
        x_p2 = x_p1 * d
        env = 1.0 / d + a * x_p0 + b * x_p1 + c * x_p2               # (TM, 1)
        # Faithful to the PyTorch module: mask on the *scaled* distance.
        env = jnp.where(d > cutoff_f, 0.0, env)
        out_ref[...] = env * jnp.sin(freq_ref[...] * d)              # (TM, G)

    out = pl.pallas_call(
        _bessel_kernel,
        out_shape=jax.ShapeDtypeStruct((n, num_radial), jnp.float32),
        grid=grid,
        in_specs=[
            # tile of distances: (block_rows, 1); last dim == full array dim
            pl.BlockSpec((block_rows, 1), lambda i: (i, 0)),
            # full freq row, same block every step -> fetched once
            pl.BlockSpec((1, num_radial), lambda i: (0, 0)),
        ],
        out_specs=pl.BlockSpec((block_rows, num_radial), lambda i: (i, 0)),
        compiler_params=pltpu.CompilerParams(
            dimension_semantics=("parallel",)),
    )(dist_col, freq_row)

    return out.reshape(orig_shape + (num_radial,))


def _reference(dist, num_radial=12, cutoff=5.0, envelope_exponent=5):
    p = envelope_exponent + 1
    a = -(p + 1) * (p + 2) / 2.0
    b = float(p * (p + 2))
    c = -p * (p + 1) / 2.0
    freq = jnp.arange(1, num_radial + 1, dtype=jnp.float32) * math.pi
    d = dist[..., None].astype(jnp.float32) / cutoff
    x0 = d ** (p - 1)
    x1 = x0 * d
    x2 = x1 * d
    env = 1.0 / d + a * x0 + b * x1 + c * x2
    env = jnp.where(d > cutoff, 0.0, env)
    return env * jnp.sin(freq * d)


if __name__ == "__main__":
    key = jax.random.PRNGKey(0)
    # Small deterministic distances (e.g. 2 "graphs" x 8 edges), away from 0
    # so the 1/x envelope term stays finite for the comparison.
    dist = jax.random.uniform(key, (2, 8), minval=0.5, maxval=4.5,
                              dtype=jnp.float32)

    num_radial = 12
    out = bessel_basis_layer(dist, num_radial=num_radial, cutoff=5.0,
                             envelope_exponent=5)
    out = jax.block_until_ready(out)

    ref = _reference(dist, num_radial=num_radial, cutoff=5.0,
                     envelope_exponent=5)
    assert out.shape == (2, 8, num_radial), out.shape
    assert jnp.allclose(out, ref, atol=1e-5, rtol=1e-5), \
        float(jnp.max(jnp.abs(out - ref)))

    print("KERNEL_OK")
</pallas_src>

<mosaic_0001>
module attributes {stable_mosaic.version = 11 : i64} {
  func.func @_bessel_kernel(%arg0: i32, %arg1: memref<8x1xf32, #tpu.memory_space<vmem>>, %arg2: memref<1x12xf32, #tpu.memory_space<vmem>>, %arg3: memref<8x12xf32, #tpu.memory_space<vmem>>) attributes {dimension_semantics = [#tpu.dimension_semantics<parallel>], iteration_bounds = array<i64: 2>, scalar_prefetch = 0 : i64, scratch_operands = 0 : i64, tpu.core_type = #tpu.core_type<tc>, window_params = [{transform_indices = @transform_0, window_bounds = array<i64: 8, 1>}, {pipeline_mode = #tpu.pipeline_mode<synchronous>, transform_indices = @transform_1, window_bounds = array<i64: 1, 12>}, {transform_indices = @transform_2, window_bounds = array<i64: 8, 12>}]} {
    %c0 = arith.constant 0 : index
    %c0_0 = arith.constant 0 : index
    %0 = vector.load %arg1[%c0, %c0_0] : memref<8x1xf32, #tpu.memory_space<vmem>>, vector<8x1xf32>
    %cst = arith.constant 5.000000e+00 : f32
    %1 = vector.broadcast %cst : f32 to vector<8x1xf32>
    %2 = arith.divf %0, %1 : vector<8x1xf32>
    %3 = arith.mulf %2, %2 : vector<8x1xf32>
    %4 = arith.mulf %3, %3 : vector<8x1xf32>
    %5 = arith.mulf %2, %4 : vector<8x1xf32>
    %6 = arith.mulf %5, %2 : vector<8x1xf32>
    %7 = arith.mulf %6, %2 : vector<8x1xf32>
    %cst_1 = arith.constant 1.000000e+00 : f32
    %8 = vector.broadcast %cst_1 : f32 to vector<8x1xf32>
    %9 = arith.divf %8, %2 : vector<8x1xf32>
    %cst_2 = arith.constant -2.800000e+01 : f32
    %10 = vector.broadcast %cst_2 : f32 to vector<8x1xf32>
    %11 = arith.mulf %10, %5 : vector<8x1xf32>
    %12 = arith.addf %9, %11 : vector<8x1xf32>
    %cst_3 = arith.constant 4.800000e+01 : f32
    %13 = vector.broadcast %cst_3 : f32 to vector<8x1xf32>
    %14 = arith.mulf %13, %6 : vector<8x1xf32>
    %15 = arith.addf %12, %14 : vector<8x1xf32>
    %cst_4 = arith.constant -2.100000e+01 : f32
    %16 = vector.broadcast %cst_4 : f32 to vector<8x1xf32>
    %17 = arith.mulf %16, %7 : vector<8x1xf32>
    %18 = arith.addf %15, %17 : vector<8x1xf32>
    %cst_5 = arith.constant 5.000000e+00 : f32
    %19 = vector.broadcast %cst_5 : f32 to vector<8x1xf32>
    %20 = arith.cmpf ogt, %2, %19 : vector<8x1xf32>
    %cst_6 = arith.constant 0.000000e+00 : f32
    %21 = vector.broadcast %cst_6 : f32 to vector<8x1xf32>
    %22 = arith.select %20, %21, %18 : vector<8x1xi1>, vector<8x1xf32>
    %c0_7 = arith.constant 0 : index
    %c0_8 = arith.constant 0 : index
    %23 = vector.load %arg2[%c0_7, %c0_8] : memref<1x12xf32, #tpu.memory_space<vmem>>, vector<1x12xf32>
    %24 = vector.broadcast %23 : vector<1x12xf32> to vector<8x12xf32>
    %25 = vector.broadcast %2 : vector<8x1xf32> to vector<8x12xf32>
    %26 = arith.mulf %24, %25 : vector<8x12xf32>
    %27 = math.sin %26 : vector<8x12xf32>
    %28 = vector.broadcast %22 : vector<8x1xf32> to vector<8x12xf32>
    %29 = arith.mulf %28, %27 : vector<8x12xf32>
    %c0_9 = arith.constant 0 : index
    %c0_10 = arith.constant 0 : index
    %30 = vector.load %arg3[%c0_9, %c0_10] : memref<8x12xf32, #tpu.memory_space<vmem>>, vector<8x12xf32>
    tpu.vector_store %arg3[%c0_9, %c0_10], %29 {strides = array<i32>} : memref<8x12xf32, #tpu.memory_space<vmem>>, vector<8x12xf32>,
    return
  }
  func.func @transform_0(%arg0: i32) -> (i32, i32) {
    %c0_i32 = arith.constant 0 : i32
    %c0_i32_0 = arith.constant 0 : i32
    return %arg0, %c0_i32 : i32, i32
  }
  func.func @transform_1(%arg0: i32) -> (i32, i32) {
    %c0_i32 = arith.constant 0 : i32
    %c0_i32_0 = arith.constant 0 : i32
    %c0_i32_1 = arith.constant 0 : i32
    return %c0_i32, %c0_i32_0 : i32, i32
  }
  func.func @transform_2(%arg0: i32) -> (i32, i32) {
    %c0_i32 = arith.constant 0 : i32
    %c0_i32_0 = arith.constant 0 : i32
    return %arg0, %c0_i32 : i32, i32
  }
}

</mosaic_0001>

<llo_original>
// kernel: tpu_custom_call.1
$region0: #{tpu_custom_call.1}
  #allocation0 [shape = 'u32[]', space=smem, size = 0x4, offset = 0x4, fixed_abs, tag = 'smem constant byte address 0x4 - core index']
  #allocation1 [shape = 'u32[72,128]{1,0:T(1,128)}', space=vmem, size = 0x9000, scoped, tag = 'internal scratch']
  %s0 = inlined_call_operand.vmem [shape: f32[16,1], index: 0, kind: input, shape index: {}]
  %s1 = inlined_call_operand.vmem [shape: f32[1,12], index: 1, kind: input, shape index: {}]
  %s2 = inlined_call_operand.hbm [shape: f32[16,12], index: 2, kind: output, shape index: {}]
  %s3 = sld [smem:[#allocation0]]
  $region41: #{tpu_custom_call.1} parent=0
    _
  %s5 = ssub.s32 1, %s3
  %s6 = scalar_select 0, %s5, %s3
  $region1: #{tpu_custom_call.1} parent=0
    #allocation2 [shape = 'u8[8192]{0}', space=vmem, size = 0x2000, scoped, tag = 'output window, operand 0']
    #allocation3 [shape = 's32[2]{0}', space=sflag, size = 0x8, scoped, tag = 'scoped memory for tpu_custom_call.1']
    %7 = vsyncpa [#allocation3], 0
    %s8 = scalar_lea.sflag [#allocation3], 1
    %9 = vsyncpa %s8, 0
    loop: start=0, step=1, limit=4
    $region2: #{tpu_custom_call.1} parent=1 // loop_pre_header
      _
    $region3: #{tpu_custom_call.1} parent=1 // loop_header
      %s11 = sphi 0, %s15
      %p12 = scmp.ge.s32.totalorder %s11, 4
      %s21 = sphi 0, %s23
      %s24 = sphi 0, %s21
      %s25 = sphi 0, %s24
      %s41 = sphi 0, %s25
      %s45 = sphi 0, %s45
      %s47 = sphi 0, %s45
      %s48 = sphi 0, %s47
      %s62 = sphi 0, %s48
      %s68 = sphi 0, %s70
      %s71 = sphi 0, %s68
      %s72 = sphi 0, %s71
      %s88 = sphi 0, %s72
    $region4: #{tpu_custom_call.1} parent=1 // loop_header_branch
      %14 = sbr.rel (%p12) target = $region8
    $region5: #{tpu_custom_call.1} parent=1 // loop_body
      %s16 = ssub.s32 %s11, 1
      %s17 = ssub.s32 %s11, 2
      %s18 = sadd.s32 %s11, 1
      %s19 = ssub.s32 %s11, %s18
      %p20 = scmp.eq.s32.totalorder %s19, 0
      %s22 = sadd.s32 %s21, 1
      %s23 = scalar_select %p20, %s21, %s22
      %p26 = pneg %p20
      %p27 = scmp.eq.s32.totalorder %s11, 1
      %p28 = por %p26, %p27
      %p29 = scmp.ne.s32.totalorder %s21, %s24
      %p30 = scmp.eq.s32.totalorder %s11, 0
      %p31 = por %p29, %p30
      %p32 = scmp.ne.s32.totalorder %s21, %s24
      %p33 = scmp.eq.s32.totalorder %s16, 1
      %p34 = por %p32, %p33
      %p35 = scmp.ne.s32.totalorder %s24, %s25
      %p36 = scmp.eq.s32.totalorder %s16, 0
      %p37 = por %p35, %p36
      %p38 = scmp.ne.s32.totalorder %s24, %s25
      %p39 = scmp.eq.s32.totalorder %s17, 1
      %p40 = por %p38, %p39
      %p42 = scmp.ne.s32.totalorder %s25, %s41
      %p43 = scmp.eq.s32.totalorder %s17, 0
      %p44 = por %p42, %p43
      %s46 = sadd.s32 %s45, 1
      %p49 = scmp.eq.s32.totalorder %s11, 1
      %p50 = scmp.ne.s32.totalorder %s45, %s47
      %p51 = scmp.eq.s32.totalorder %s11, 0
      %p52 = por %p50, %p51
      %p53 = scmp.ne.s32.totalorder %s45, %s47
      %p54 = scmp.eq.s32.totalorder %s16, 1
      %p55 = por %p53, %p54
      %p56 = scmp.ne.s32.totalorder %s47, %s48
      %p57 = scmp.eq.s32.totalorder %s16, 0
      %p58 = por %p56, %p57
      %p59 = scmp.ne.s32.totalorder %s47, %s48
      %p60 = scmp.eq.s32.totalorder %s17, 1
      %p61 = por %p59, %p60
      %p63 = scmp.ne.s32.totalorder %s48, %s62
      %p64 = scmp.eq.s32.totalorder %s17, 0
      %p65 = por %p63, %p64
      %s66 = ssub.s32 %s11, %s18
      %p67 = scmp.eq.s32.totalorder %s66, 0
      %s69 = sadd.s32 %s68, 1
      %s70 = scalar_select %p67, %s68, %s69
      %p73 = pneg %p67
      %p74 = scmp.eq.s32.totalorder %s11, 1
      %p75 = por %p73, %p74
      %p76 = scmp.ne.s32.totalorder %s68, %s71
      %p77 = scmp.eq.s32.totalorder %s11, 0
      %p78 = por %p76, %p77
      %p79 = scmp.ne.s32.totalorder %s68, %s71
      %p80 = scmp.eq.s32.totalorder %s16, 1
      %p81 = por %p79, %p80
      %p82 = scmp.ne.s32.totalorder %s71, %s72
      %p83 = scmp.eq.s32.totalorder %s16, 0
      %p84 = por %p82, %p83
      %p85 = scmp.ne.s32.totalorder %s71, %s72
      %p86 = scmp.eq.s32.totalorder %s17, 1
      %p87 = por %p85, %p86
      %p89 = scmp.ne.s32.totalorder %s72, %s88
      %p90 = scmp.eq.s32.totalorder %s17, 0
      %p91 = por %p89, %p90
      %p92 = scmp.le.s32.totalorder 1, %s11
      %p93 = scmp.lt.s32.totalorder %s11, 3
      %p94 = pnand %p92, %p93
      %p95 = pneg %p94
      // Predicated region
      $region9: #{tpu_custom_call.1} parent=5 // pred_check
        _
      $region10: #{tpu_custom_call.1} parent=5 // pred_check_branch
        %97 = sbr.rel (%p94) target = $region12
      $region11: #{tpu_custom_call.1} parent=5 // pred_region
        %s98 = ssub.s32 %s11, 1
        // Predicated region
        $region13: #{tpu_custom_call.1} parent=11 // pred_check
          %p99 = pneg %p58
        $region14: #{tpu_custom_call.1} parent=11 // pred_check_branch
          %101 = sbr.rel (%p99) target = $region16
        $region15: #{tpu_custom_call.1} parent=11 // pred_region
          _
        $region16: #{tpu_custom_call.1} parent=11 // pred_fallthru
          _
      $region12: #{tpu_custom_call.1} parent=5 // pred_fallthru
        _
      %p102 = scmp.lt.s32.totalorder %s11, 2
      // Predicated region
      $region17: #{tpu_custom_call.1} parent=5 // pred_check
        %p103 = pneg %p102
      $region18: #{tpu_custom_call.1} parent=5 // pred_check_branch
        %105 = sbr.rel (%p103) target = $region20
      $region19: #{tpu_custom_call.1} parent=5 // pred_region
        // Predicated region
        $region21: #{tpu_custom_call.1} parent=19 // pred_check
          %p106 = pneg %p31
        $region22: #{tpu_custom_call.1} parent=19 // pred_check_branch
          %108 = sbr.rel (%p106) target = $region24
        $region23: #{tpu_custom_call.1} parent=19 // pred_region
          %p109 = scmp.lt.s32.totalorder %s11, 1
          %s110 = scalar_select %p109, %s11, 1
          %s111 = smul.addr %s110, 8
          %s112 = scalar_lea.vmem %s0, %s111
        $region24: #{tpu_custom_call.1} parent=19 // pred_fallthru
          _
      $region20: #{tpu_custom_call.1} parent=5 // pred_fallthru
        _
      %p113 = scmp.le.s32.totalorder 1, %s11
      %p114 = scmp.lt.s32.totalorder %s11, 3
      %p115 = pnand %p113, %p114
      %p116 = pneg %p115
      // Predicated region
      $region25: #{tpu_custom_call.1} parent=5 // pred_check
        _
      $region26: #{tpu_custom_call.1} parent=5 // pred_check_branch
        %118 = sbr.rel (%p115) target = $region28
      $region27: #{tpu_custom_call.1} parent=5 // pred_region
        %s119 = ssub.s32 %s11, 1
        %p120 = scmp.lt.s32.totalorder %s16, 1
        %s121 = scalar_select %p120, %s16, 1
        %s122 = smul.addr %s121, 8
        %s123 = scalar_lea.vmem %s0, %s122
        %p124 = pneg %p37
        %p125 = pneg %p34
        %p126 = pneg %p58
        %p127 = pneg %p55
        %p128 = pneg %p84
        %p129 = pneg %p81
        %s130 = sand.u32 %s71, 1
        %s131 = scalar_lea.sflag [#allocation3], %s130
        %s132 = sand.u32 %s71, 1
        %s133 = smul.addr %s132, 8
        %s134 = scalar_lea.vmem [#allocation2], %s133
        %p135 = scmp.lt.s32.totalorder %s16, 1
        %s136 = scalar_select %p135, %s16, 1
        %s137 = smul.addr %s136, 8
        %s138 = scalar_lea.vmem %s0, %s137
        %v139 = vld [vmem:[%s138] sm:$0xff]
        %v140 = vrcp.pop 5.0
        %v141 = vmul.f32 5.0, %v140
        %v142 = vsub.f32 1.0, %v141
        %v143 = vmul.f32 %v140, %v142
        %v144 = vadd.f32 %v140, %v143
        %vm145 = vweird.f32 %v140
        %v146 = vsel %vm145, %v140, %v144
        %v147 = vmul.f32 %v139, %v146
        %v148 = vmul.f32 %v147, %v147
        %v149 = vmul.f32 %v148, %v148
        %v150 = vmul.f32 %v147, %v149
        %v151 = vmul.f32 %v150, %v147
        %v152 = vmul.f32 %v151, %v147
        %v153 = vrcp.pop %v147
        %v154 = vmul.f32 %v147, %v153
        %v155 = vsub.f32 1.0, %v154
        %v156 = vmul.f32 %v153, %v155
        %v157 = vadd.f32 %v153, %v156
        %vm158 = vweird.f32 %v147
        %vm159 = vweird.f32 %v153
        %vm160 = vmor %vm158, %vm159
        %v161 = vsel %vm160, %v153, %v157
        %v162 = vand.u32 2147483647, %v147
        %vm163 = vcmp.eq.f32.partialorder %v162, 8.507059e+37
        %v164 = vand.u32 %v147, 2147483648
        %v165 = vor.u32 1.1754944e-38, %v164
        %v166 = vsel %vm163, %v165, %v161
        %v167 = vmul.f32 1.0, %v166
        %v168 = vmul.f32 %v150, -28.0
        %v169 = vadd.f32 %v167, %v168
        %v170 = vmul.f32 %v151, 48.0
        %v171 = vadd.f32 %v169, %v170
        %v172 = vmul.f32 %v152, -21.0
        %v173 = vadd.f32 %v171, %v172
        %vm174 = vcmp.gt.f32.partialorder %v147, 5.0
        %v175 = vsel %vm174, 0.0, %v173
        %v176 = vld [vmem:[%s1] sm:$0x1]
        %v178 = vperm.slane %v176, 0
        %181 = vset.pattern.permute.xlu0 0
        %182 = vperm.xlu0 %181, %v147
        %v183 = vpop.permute.xlu0 %182
        %v185 = vmul.f32 %v178, %v183
        %v186 = vand.u32 2147483647, %v185
        %vm187 = vcmp.le.f32.partialorder %v186, 0.7853982
        %vm188 = vcmp.lt.s32.totalorder %v185, 0
        %v189 = vand.u32 %v185, 2139095040
        %v190 = vshrl.u32 %v189, 23
        %v191 = vsub.s32 %v190, 127
        %v192 = vand.u32 2147483647, %v185
        %v193 = vand.u32 %v192, 8388607
        %v194 = vor.u32 %v193, 8388608
        %v195 = vsub.s32 0, %v194
        %v196 = vadd.s32 %v191, 1
        %vm197 = vcmp.gt.s32.totalorder %v196, 0
        %v198 = vsel %vm197, %v196, 0
        %v199 = vshrl.u32 %v198, 5
        %v200 = vand.u32 %v198, 31
        %v201 = vsub.s32 32, %v200
        %v202 = vshrl.u32 683565275, %v201
        %v203 = vshll.u32 683565275, %v200
        %v204 = vshrl.u32 2475754826, %v201
        %v205 = vor.u32 %v203, %v204
        %v206 = vshll.u32 2475754826, %v200
        %v207 = vshrl.u32 2131351028, %v201
        %v208 = vor.u32 %v206, %v207
        %v209 = vshll.u32 2131351028, %v200
        %v210 = vshrl.u32 2102212464, %v201
        %v211 = vor.u32 %v209, %v210
        %v212 = vshll.u32 2102212464, %v200
        %v213 = vshrl.u32 920167782, %v201
        %v214 = vor.u32 %v212, %v213
        %v215 = vshll.u32 920167782, %v200
        %v216 = vshrl.u32 1326507024, %v201
        %v217 = vor.u32 %v215, %v216
        %vm218 = vcmp.lt.s32.totalorder %v199, 1
        %vm219 = vcmp.lt.s32.totalorder %v199, 2
        %vm220 = vcmp.lt.s32.totalorder %v199, 3
        %vm221 = vcmp.lt.s32.totalorder %v199, 4
        %v222 = vsel %vm218, %v202, %v205
        %v223 = vsel %vm221, %v211, 2102212464
        %v224 = vsel %vm220, %v208, %v223
        %v225 = vsel %vm219, %v222, %v224
        %v226 = vsel %vm218, %v205, %v208
        %v227 = vsel %vm221, %v214, 920167782
        %v228 = vsel %vm220, %v211, %v227
        %v229 = vsel %vm219, %v226, %v228
        %v230 = vsel %vm218, %v208, %v211
        %v231 = vsel %vm221, %v217, 1326507024
        %v232 = vsel %vm220, %v214, %v231
        %v233 = vsel %vm219, %v230, %v232
        %v234 = vshll.u32 %v194, 8
        %v235 = vand.u32 %v234, 65535
        %v236 = vshrl.u32 %v234, 16
        %v237 = vand.u32 %v233, 65535
        %v238 = vshrl.u32 %v233, 16
        %v239 = vmul.u32 %v235, %v237
        %v240 = vmul.u32 %v235, %v238
        %v241 = vmul.u32 %v236, %v237
        %v242 = vmul.u32 %v236, %v238
        %v243 = vshll.u32 %v240, 16
        %v244 = vshrl.u32 %v240, 16
        %v245 = vshll.u32 %v241, 16
        %v246 = vshrl.u32 %v241, 16
        %vm247 = vc.u32 %v239, %v243
        %v248 = vsel %vm247, 1, 0
        %v249 = vadd.s32 %v239, %v243
        %v250 = vadd.s32 %v242, %v248
        %vm251 = vc.u32 %v249, %v245
        %v252 = vsel %vm251, 1, 0
        %v253 = vadd.s32 %v249, %v245
        %v254 = vadd.s32 %v250, %v252
        %v255 = vadd.s32 %v254, %v244
        %v256 = vadd.s32 %v255, %v246
        %v257 = vand.u32 %v234, 65535
        %v258 = vshrl.u32 %v234, 16
        %v259 = vand.u32 %v229, 65535
        %v260 = vshrl.u32 %v229, 16
        %v261 = vmul.u32 %v257, %v259
        %v262 = vmul.u32 %v257, %v260
        %v263 = vmul.u32 %v258, %v259
        %v264 = vmul.u32 %v258, %v260
        %v265 = vshll.u32 %v262, 16
        %v266 = vshrl.u32 %v262, 16
        %v267 = vshll.u32 %v263, 16
        %v268 = vshrl.u32 %v263, 16
        %vm269 = vc.u32 %v261, %v265
        %v270 = vsel %vm269, 1, 0
        %v271 = vadd.s32 %v261, %v265
        %v272 = vadd.s32 %v264, %v270
        %vm273 = vc.u32 %v271, %v267
        %v274 = vsel %vm273, 1, 0
        %v275 = vadd.s32 %v271, %v267
        %v276 = vadd.s32 %v272, %v274
        %v277 = vadd.s32 %v276, %v266
        %v278 = vadd.s32 %v277, %v268
        %v279 = vmul.u32 %v234, %v225
        %v280 = vadd.s32 %v256, %v275
        %vm281 = vc.u32 %v256, %v275
        %v282 = vadd.s32 %v278, 1
        %v283 = vsel %vm281, %v282, %v278
        %v284 = vadd.s32 %v279, %v283
        %v285 = vadd.s32 %v284, 536870912
        %v286 = vshrl.u32 %v285, 30
        %v287 = vshll.u32 %v286, 30
        %v288 = vsub.s32 %v284, %v287
        %vm289 = vcmp.lt.s32.totalorder %v288, 0
        %v290 = vsub.s32 0, %v288
        %v291 = vsel %vm289, %v290, %v288
        %v292 = vclz %v291
        %v293 = vsub.s32 %v292, 2
        %vm294 = vcmp.gt.s32.totalorder 0, %v293
        %v295 = vsel %vm294, 0, %v293
        %v296 = vsub.s32 32, %v295
        %v297 = vshll.u32 %v288, %v295
        %v298 = vshrl.u32 %v280, %v296
        %v299 = vor.u32 %v297, %v298
        %v300 = vsub.s32 4294967266, %v295
        %v301 = vadd.s32 %v300, 127
        %v302 = vshll.u32 %v301, 23
        %v303 = vor.u32 4788187, %v302
        %v304 = vand.u32 2147483647, %v303
        %v306 = vcvt.s32.f32 %v299
        %v307 = vmul.f32 %v306, %v304
        %v308 = vxor.u32 %v307, 2147483648
        %v309 = vsel %vm188, %v308, %v307
        %v310 = vsub.s32 4, %v286
        %v311 = vsel %vm188, %v310, %v286
        %v312 = vsel %vm187, %v185, %v309
        %v313 = vsel %vm187, 0, %v311
        %v314 = vmul.f32 %v312, %v312
        %v315 = vmul.f32 %v314, -0.001358992
        %v316 = vadd.f32 %v315, 0.041655596
        %v317 = vmul.f32 %v314, %v316
        %v318 = vadd.f32 %v317, -0.4999988
        %v319 = vmul.f32 %v314, %v318
        %v320 = vadd.f32 1.0, %v319
        %v321 = vmul.f32 %v312, %v312
        %v322 = vmul.f32 %v321, -0.00019511016
        %v323 = vadd.f32 %v322, 0.008332121
        %v324 = vmul.f32 %v321, %v323
        %v325 = vadd.f32 %v324, -0.16666654
        %v326 = vmul.f32 %v321, %v325
        %v327 = vadd.f32 %v326, 1.0
        %v328 = vmul.f32 %v327, %v312
        %vm329 = vweird.f32 %v185
        %v330 = vadd.s32 %v313, 3
        %v331 = vand.u32 %v330, 3
        %vm332 = vcmp.lt.s32.totalorder %v331, 2
        %vm333 = vcmp.eq.s32.totalorder %v331, 0
        %v334 = vxor.u32 %v328, 2147483648
        %v335 = vsel %vm333, %v320, %v334
        %vm336 = vcmp.eq.s32.totalorder %v331, 2
        %v337 = vxor.u32 %v320, 2147483648
        %v338 = vsel %vm336, %v337, %v328
        %v339 = vsel %vm332, %v335, %v338
        %v340 = vsel %vm329, nan, %v339
        %342 = vset.pattern.permute.xlu0 0
        %343 = vperm.xlu0 %342, %v175
        %v344 = vpop.permute.xlu0 %343
        %v346 = vmul.f32 %v344, %v340
        %vm347 = vcmask 97280
        %348 = vst.msk [vmem:[%s134] sm:$0xff] %vm347, %v346
        %s349 = sand.u32 %s71, 1
        %s350 = scalar_lea.sflag [#allocation3], %s349
        %s351 = sand.u32 %s71, 1
        %s352 = smul.addr %s351, 8
        %s353 = scalar_lea.vmem [#allocation2], %s352
        // Predicated region
        $region29: #{tpu_custom_call.1} parent=27 // pred_check
          %p354 = pneg %p81
        $region30: #{tpu_custom_call.1} parent=27 // pred_check_branch
          %356 = sbr.rel (%p354) target = $region32
        $region31: #{tpu_custom_call.1} parent=27 // pred_region
          %358 = vsyncadd %s350, 0
          %s359 = smul.addr %s16, 8
          %s360 = scalar_lea.hbm %s2, %s359
          %s362 = sshll.u32 %s353, 4
          %s363 = int_to_ptr.vmem [resolvable:$true] %s362
          %s364 = sshll.u32 %s360, 4
          %s365 = int_to_ptr.hbm [resolvable:$true] %s364
          %367 = dma.vmem_to_hbm [thread:$0]  %s363, 128, %s365, %s350
        $region32: #{tpu_custom_call.1} parent=27 // pred_fallthru
          _
      $region28: #{tpu_custom_call.1} parent=5 // pred_fallthru
        _
      %p368 = scmp.le.s32.totalorder 2, %s11
      // Predicated region
      $region33: #{tpu_custom_call.1} parent=5 // pred_check
        %p369 = pneg %p368
      $region34: #{tpu_custom_call.1} parent=5 // pred_check_branch
        %371 = sbr.rel (%p369) target = $region36
      $region35: #{tpu_custom_call.1} parent=5 // pred_region
        %s372 = ssub.s32 %s11, 2
        // Predicated region
        $region37: #{tpu_custom_call.1} parent=35 // pred_check
          %p373 = pneg %p87
        $region38: #{tpu_custom_call.1} parent=35 // pred_check_branch
          %375 = sbr.rel (%p373) target = $region40
        $region39: #{tpu_custom_call.1} parent=35 // pred_region
          %s376 = sand.u32 %s72, 1
          %s377 = scalar_lea.sflag [#allocation3], %s376
          %s378 = sand.u32 %s72, 1
          %s379 = smul.addr %s378, 8
          %s380 = scalar_lea.vmem [#allocation2], %s379
          %382 = dma.done %s377, 128
        $region40: #{tpu_custom_call.1} parent=35 // pred_fallthru
          _
      $region36: #{tpu_custom_call.1} parent=5 // pred_fallthru
        _
    $region6: #{tpu_custom_call.1} parent=1 // loop_footer
      %s15 = sadd.s32 1, %s11
    $region7: #{tpu_custom_call.1} parent=1 // loop_footer_branch
      %10 = sbr.rel target = $region3
    $region8: #{tpu_custom_call.1} parent=1 // loop_exit
      _
    %383 = vsyncpa [#allocation3], 1
    %s384 = scalar_lea.sflag [#allocation3], 1
    %385 = vsyncpa %s384, 1

</llo_original>
